<compile_context>
chip_gen: v5e
topology: v5e:2x2
jax: 0.10.0
libtpu: 0.0.40
codegen_flags: <defaults>
</compile_context>

<pallas_src>
import math

import jax
import jax.numpy as jnp
from jax.experimental import pallas as pl
from jax.experimental.pallas import tpu as pltpu

_INV_SQRT2 = 0.7071067811865476       # 1 / sqrt(2)
_SQRT_2_OVER_PI = 0.7978845608028654  # sqrt(2 / pi)


def _gelu_exact(h):
    # PyTorch nn.GELU default: 0.5 * x * (1 + erf(x / sqrt(2)))
    return 0.5 * h * (1.0 + jax.lax.erf(h * _INV_SQRT2))


def _gelu_tanh(h):
    # tanh approximation (goes to the EUP slot); opt-in only.
    return 0.5 * h * (1.0 + jnp.tanh(_SQRT_2_OVER_PI * (h + 0.044715 * h * h * h)))


# ----------------------------------------------------------------------------
# Kernels
# ----------------------------------------------------------------------------
def _make_resident_kernel(gelu):
    """grid = (row tiles,). W1/W2/b1/b2 index maps are constant, so both weight
    matrices stay VMEM-resident and are fetched from HBM exactly once."""
    def kernel(x_ref, w1_ref, b1_ref, w2_ref, b2_ref, o_ref):
        h = jnp.dot(x_ref[...], w1_ref[...], preferred_element_type=jnp.float32)
        h = gelu(h + b1_ref[...])
        out = jnp.dot(h.astype(w2_ref.dtype), w2_ref[...],
                      preferred_element_type=jnp.float32)
        o_ref[...] = (out + b2_ref[...]).astype(o_ref.dtype)
    return kernel


def _make_out_acc_kernel(gelu):
    """grid = (row tiles, hidden tiles). f32 output block is resident across the
    hidden axis (its index map ignores j), so fc2 partials accumulate directly
    into o_ref — no scratch accumulator, no epilogue copy."""
    def kernel(x_ref, w1_ref, b1_ref, w2_ref, b2_ref, o_ref):
        j = pl.program_id(1)
        h = jnp.dot(x_ref[...], w1_ref[...], preferred_element_type=jnp.float32)
        h = gelu(h + b1_ref[...])
        part = jnp.dot(h.astype(w2_ref.dtype), w2_ref[...],
                       preferred_element_type=jnp.float32)

        @pl.when(j == 0)
        def _():
            o_ref[...] = part + b2_ref[...]

        @pl.when(j > 0)
        def _():
            o_ref[...] += part
    return kernel


def _make_scratch_acc_kernel(gelu):
    """grid = (row tiles, hidden tiles). Low-precision output: accumulate fc2
    partials in an f32 VMEM scratch, cast once on the last hidden step."""
    def kernel(x_ref, w1_ref, b1_ref, w2_ref, b2_ref, o_ref, acc_ref):
        j = pl.program_id(1)

        @pl.when(j == 0)
        def _():
            acc_ref[...] = jnp.zeros_like(acc_ref)

        h = jnp.dot(x_ref[...], w1_ref[...], preferred_element_type=jnp.float32)
        h = gelu(h + b1_ref[...])
        acc_ref[...] += jnp.dot(h.astype(w2_ref.dtype), w2_ref[...],
                                preferred_element_type=jnp.float32)

        @pl.when(j == pl.num_programs(1) - 1)
        def _():
            o_ref[...] = (acc_ref[...] + b2_ref[...]).astype(o_ref.dtype)
    return kernel


# ----------------------------------------------------------------------------
# Wrapper
# ----------------------------------------------------------------------------
def mlp_pallas(x, w1, b1, w2, b2, *, tm=512, th=1024, compute_dtype=None,
               out_dtype=None, approximate_gelu=False,
               vmem_budget_bytes=None, vmem_limit_bytes=None):
    """x: (B, N, D); w1: (D, H); b1: (H,); w2: (H, Dout); b2: (Dout,).

    compute_dtype: optional dtype (e.g. jnp.bfloat16) for the matmul inputs;
    accumulation is always float32.
    vmem_budget_bytes: optional override of the VMEM budget used for tile
    selection (mostly for testing the streamed-weight paths).
    """
    B, N, D = x.shape
    H = w1.shape[1]
    Dout = w2.shape[1]

    if compute_dtype is not None:
        x = x.astype(compute_dtype)
        w1 = w1.astype(compute_dtype)
        w2 = w2.astype(compute_dtype)
    out_dtype = jnp.dtype(out_dtype or x.dtype)

    gelu = _gelu_tanh if approximate_gelu else _gelu_exact

    M = B * N
    x2d = x.reshape(M, D)
    insz = jnp.dtype(x2d.dtype).itemsize
    outsz = out_dtype.itemsize

    # --- VMEM budget: generation-aware (64 MiB/TC on v7x, 128 MiB on v5e/v6e).
    try:
        vmem_cap = int(pltpu.get_tpu_info().vmem_capacity_bytes)
    except Exception:
        vmem_cap = 64 * 1024 * 1024  # conservative fallback (v7x-sized)
    budget = (int(vmem_cap * 0.85) if vmem_budget_bytes is None
              else int(vmem_budget_bytes))

    def bytes_needed(tm_, th_, scratch):
        # 2x: Pallas double-buffers every BlockSpec-managed operand.
        b = 2 * (tm_ * D * insz          # x row tile
                 + D * th_ * insz        # W1 slab
                 + th_ * 4               # b1 (f32)
                 + th_ * Dout * insz     # W2 slab
                 + Dout * 4              # b2 (f32)
                 + tm_ * Dout * outsz)   # output tile
        if scratch:
            b += tm_ * Dout * 4          # f32 accumulator
        return b

    # --- Row tile (multiple of 16 covers f32 sublane-8 and bf16 sublane-16).
    row_align = 16
    Mr = pl.cdiv(M, row_align) * row_align
    tm = max(row_align, min(int(tm), Mr))
    tm = (tm // row_align) * row_align
    # Keep >= 2 row tiles when halves are still large, so the "parallel" row
    # axis can shard across v7x's two TensorCores instead of idling one.
    if tm >= Mr and Mr >= 512:
        tm = pl.cdiv(Mr, 2 * row_align) * row_align

    # --- Path A: weights fully VMEM-resident (th = H, single hidden step).
    min_tm = max(row_align, min(tm, 256))
    tm_res = tm
    while tm_res > min_tm and bytes_needed(tm_res, H, False) > budget:
        tm_res = max(min_tm, ((tm_res // 2) // row_align) * row_align)
    resident = bytes_needed(tm_res, H, False) <= budget

    use_scratch = False
    if resident:
        tm, th = tm_res, H
    else:
        # --- Path B: stream W1/W2 through VMEM in th-wide slabs, f32 accumulate.
        use_scratch = out_dtype != jnp.dtype(jnp.float32)

        def th_candidates(h_req):
            cands = [t for t in range(128, H + 1, 128)
                     if H % t == 0 and t <= h_req]
            # TODO(synk): pad H instead of falling back to the full hidden dim
            # when H has no multiple-of-128 divisor.
            return sorted(cands, reverse=True) if cands else [H]

        cands = th_candidates(int(th))
        chosen = None
        tm_c = tm
        while chosen is None:
            for th_c in cands:
                if bytes_needed(tm_c, th_c, use_scratch) <= budget:
                    chosen = (tm_c, th_c)
                    break
            if chosen is None:
                if tm_c <= row_align:
                    chosen = (row_align, cands[-1])  # last resort
                else:
                    tm_c = max(row_align, ((tm_c // 2) // row_align) * row_align)
        tm, th = chosen

    Mp = pl.cdiv(M, tm) * tm
    if Mp != M:
        x2d = jnp.pad(x2d, ((0, Mp - M), (0, 0)))
    n_m = Mp // tm
    n_h = max(1, H // th)

    b1_2d = b1.reshape(1, H).astype(jnp.float32)
    b2_2d = b2.reshape(1, Dout).astype(jnp.float32)

    weight_passes = 1 if resident else n_m
    cost = pl.CostEstimate(
        flops=2 * Mp * (D * H + H * Dout),
        transcendentals=Mp * H,  # erf/tanh per hidden activation
        bytes_accessed=int(Mp * D * insz
                           + weight_passes * (D * H + H * Dout) * insz
                           + (H + Dout) * 4
                           + Mp * Dout * outsz),
    )

    if vmem_limit_bytes is None:
        vmem_limit_bytes = min(int(vmem_cap * 0.9),
                               bytes_needed(tm, th, use_scratch) + (8 << 20))

    if resident:
        kernel = _make_resident_kernel(gelu)
        grid_spec = pltpu.PrefetchScalarGridSpec(
            num_scalar_prefetch=0,
            grid=(n_m,),
            in_specs=[
                pl.BlockSpec((tm, D), lambda i: (i, 0)),       # x row tile
                pl.BlockSpec((D, H), lambda i: (0, 0)),        # W1 (resident)
                pl.BlockSpec((1, H), lambda i: (0, 0)),        # b1 (resident)
                pl.BlockSpec((H, Dout), lambda i: (0, 0)),     # W2 (resident)
                pl.BlockSpec((1, Dout), lambda i: (0, 0)),     # b2 (resident)
            ],
            out_specs=pl.BlockSpec((tm, Dout), lambda i: (i, 0)),
        )
        dim_sem = ("parallel",)
    else:
        in_specs = [
            pl.BlockSpec((tm, D), lambda i, j: (i, 0)),        # x row tile
            pl.BlockSpec((D, th), lambda i, j: (0, j)),        # W1 column slab
            pl.BlockSpec((1, th), lambda i, j: (0, j)),        # b1 slab
            pl.BlockSpec((th, Dout), lambda i, j: (j, 0)),     # W2 row slab
            pl.BlockSpec((1, Dout), lambda i, j: (0, 0)),      # b2 (full)
        ]
        out_spec = pl.BlockSpec((tm, Dout), lambda i, j: (i, 0))
        if use_scratch:
            kernel = _make_scratch_acc_kernel(gelu)
            scratch_shapes = [pltpu.VMEM((tm, Dout), jnp.float32)]
        else:
            kernel = _make_out_acc_kernel(gelu)
            scratch_shapes = []
        grid_spec = pltpu.PrefetchScalarGridSpec(
            num_scalar_prefetch=0,
            grid=(n_m, n_h),
            in_specs=in_specs,
            out_specs=out_spec,
            scratch_shapes=scratch_shapes,
        )
        dim_sem = ("parallel", "arbitrary")

    out2d = pl.pallas_call(
        kernel,
        out_shape=jax.ShapeDtypeStruct((Mp, Dout), out_dtype),
        grid_spec=grid_spec,
        compiler_params=pltpu.CompilerParams(
            dimension_semantics=dim_sem,
            vmem_limit_bytes=int(vmem_limit_bytes)),
        cost_estimate=cost,
    )(x2d, w1, b1_2d, w2, b2_2d)

    if Mp != M:
        out2d = out2d[:M]
    return out2d.reshape(B, N, Dout)


# ----------------------------------------------------------------------------
# Init + references + tests
# ----------------------------------------------------------------------------
def init_mlp_params(key, in_features, hidden_features, out_features,
                    dtype=jnp.float32):
    """Deterministic init mimicking nn.Linear's kaiming-uniform scheme."""
    k1, k2, k3, k4 = jax.random.split(key, 4)
    bound1 = 1.0 / math.sqrt(in_features)
    bound2 = 1.0 / math.sqrt(hidden_features)
    # stored pre-transposed: (in, hidden) and (hidden, out)
    w1 = jax.random.uniform(k1, (in_features, hidden_features),
                            minval=-bound1, maxval=bound1, dtype=dtype)
    b1 = jax.random.uniform(k2, (hidden_features,),
                            minval=-bound1, maxval=bound1, dtype=dtype)
    w2 = jax.random.uniform(k3, (hidden_features, out_features),
                            minval=-bound2, maxval=bound2, dtype=dtype)
    b2 = jax.random.uniform(k4, (out_features,),
                            minval=-bound2, maxval=bound2, dtype=dtype)
    return w1, b1, w2, b2


def mlp_reference(x, w1, b1, w2, b2):
    hp = jax.lax.Precision.HIGHEST
    h = jnp.dot(x, w1, precision=hp) + b1
    h = _gelu_exact(h)
    return jnp.dot(h, w2, precision=hp) + b2


def mlp_reference_mixed(x, w1, b1, w2, b2, *, compute_dtype):
    """Mirrors the kernel's mixed-precision math (low-precision matmul inputs,
    f32 accumulation, f32 bias/GELU, low-precision output)."""
    xc, w1c, w2c = (a.astype(compute_dtype) for a in (x, w1, w2))
    h = jnp.dot(xc, w1c, preferred_element_type=jnp.float32)
    h = h + b1.astype(jnp.float32)
    h = _gelu_exact(h)
    out = jnp.dot(h.astype(compute_dtype), w2c,
                  preferred_element_type=jnp.float32)
    out = out + b2.astype(jnp.float32)
    return out.astype(compute_dtype)


if __name__ == "__main__":
    key = jax.random.PRNGKey(0)
    kx, kp, kx2, kp2 = jax.random.split(key, 4)

    # --- Test 1: small spec-sized shapes, f32, exact GELU, resident path ----
    B, N, D = 2, 8, 32
    H, Dout = 64, 32
    x = jax.random.normal(kx, (B, N, D), dtype=jnp.float32)
    w1, b1, w2, b2 = init_mlp_params(kp, D, H, Dout)

    out = jax.block_until_ready(mlp_pallas(x, w1, b1, w2, b2))
    ref = mlp_reference(x, w1, b1, w2, b2)
    assert out.shape == (B, N, Dout)
    assert jnp.allclose(out, ref, atol=2e-5, rtol=2e-5)

    # --- Test 2: larger shapes, default path (weights VMEM-resident) --------
    B2, N2, D2, H2, Do2 = 2, 256, 128, 1024, 128
    x2 = jax.random.normal(kx2, (B2, N2, D2), dtype=jnp.float32)
    p2 = init_mlp_params(kp2, D2, H2, Do2)

    out2 = jax.block_until_ready(mlp_pallas(x2, *p2))
    ref2 = mlp_reference(x2, *p2)
    assert out2.shape == (B2, N2, Do2)
    assert jnp.allclose(out2, ref2, atol=5e-4, rtol=5e-4)

    # --- Test 3: force the streamed-weight path (hidden tiling, f32 output
    # accumulated directly into o_ref) by shrinking the VMEM budget ----------
    out3 = jax.block_until_ready(
        mlp_pallas(x2, *p2, tm=256, th=512, vmem_budget_bytes=2 * 1024 * 1024))
    assert jnp.allclose(out3, ref2, atol=5e-4, rtol=5e-4)

    # --- Test 4: bf16 MXU-native compute, streamed weights + f32 scratch acc -
    out4 = jax.block_until_ready(
        mlp_pallas(x2, *p2, tm=256, th=512, compute_dtype=jnp.bfloat16,
                   vmem_budget_bytes=1 * 1024 * 1024))
    ref4 = mlp_reference_mixed(x2, *p2, compute_dtype=jnp.bfloat16)
    assert jnp.allclose(out4.astype(jnp.float32), ref4.astype(jnp.float32),
                        atol=5e-2, rtol=5e-2)

    print("KERNEL_OK")
</pallas_src>

<mosaic_0001>
module attributes {stable_mosaic.version = 11 : i64} {
  func.func @kernel(%arg0: i32, %arg1: memref<16x32xf32, #tpu.memory_space<vmem>>, %arg2: memref<32x64xf32, #tpu.memory_space<vmem>>, %arg3: memref<1x64xf32, #tpu.memory_space<vmem>>, %arg4: memref<64x32xf32, #tpu.memory_space<vmem>>, %arg5: memref<1x32xf32, #tpu.memory_space<vmem>>, %arg6: memref<16x32xf32, #tpu.memory_space<vmem>>) attributes {dimension_semantics = [#tpu.dimension_semantics<parallel>], iteration_bounds = array<i64: 1>, scalar_prefetch = 0 : i64, scratch_operands = 0 : i64, tpu.core_type = #tpu.core_type<tc>, window_params = [{transform_indices = @transform_0, window_bounds = array<i64: 16, 32>}, {pipeline_mode = #tpu.pipeline_mode<synchronous>, transform_indices = @transform_1, window_bounds = array<i64: 32, 64>}, {pipeline_mode = #tpu.pipeline_mode<synchronous>, transform_indices = @transform_2, window_bounds = array<i64: 1, 64>}, {pipeline_mode = #tpu.pipeline_mode<synchronous>, transform_indices = @transform_3, window_bounds = array<i64: 64, 32>}, {pipeline_mode = #tpu.pipeline_mode<synchronous>, transform_indices = @transform_4, window_bounds = array<i64: 1, 32>}, {transform_indices = @transform_5, window_bounds = array<i64: 16, 32>}]} {
    %c0 = arith.constant 0 : index
    %c0_0 = arith.constant 0 : index
    %0 = vector.load %arg1[%c0, %c0_0] : memref<16x32xf32, #tpu.memory_space<vmem>>, vector<16x32xf32>
    %c0_1 = arith.constant 0 : index
    %c0_2 = arith.constant 0 : index
    %1 = vector.load %arg2[%c0_1, %c0_2] : memref<32x64xf32, #tpu.memory_space<vmem>>, vector<32x64xf32>
    %cst = arith.constant dense<0.000000e+00> : vector<16x64xf32>
    %2 = tpu.matmul %0, %1, %cst {dimension_numbers = #tpu.dot_dimension_numbers<[1], [0], [0], [1], [0, 0, 1, 1], [], []>} : vector<16x32xf32>, vector<32x64xf32>, vector<16x64xf32> -> vector<16x64xf32>
    %c0_3 = arith.constant 0 : index
    %c0_4 = arith.constant 0 : index
    %3 = vector.load %arg3[%c0_3, %c0_4] : memref<1x64xf32, #tpu.memory_space<vmem>>, vector<1x64xf32>
    %4 = vector.broadcast %3 : vector<1x64xf32> to vector<16x64xf32>
    %5 = arith.addf %2, %4 : vector<16x64xf32>
    %cst_5 = arith.constant 5.000000e-01 : f32
    %6 = vector.broadcast %cst_5 : f32 to vector<16x64xf32>
    %7 = arith.mulf %6, %5 : vector<16x64xf32>
    %cst_6 = arith.constant 0.707106769 : f32
    %8 = vector.broadcast %cst_6 : f32 to vector<16x64xf32>
    %9 = arith.mulf %5, %8 : vector<16x64xf32>
    %10 = math.erf %9 : vector<16x64xf32>
    %cst_7 = arith.constant 1.000000e+00 : f32
    %11 = vector.broadcast %cst_7 : f32 to vector<16x64xf32>
    %12 = arith.addf %11, %10 : vector<16x64xf32>
    %13 = arith.mulf %7, %12 : vector<16x64xf32>
    %c0_8 = arith.constant 0 : index
    %c0_9 = arith.constant 0 : index
    %14 = vector.load %arg4[%c0_8, %c0_9] : memref<64x32xf32, #tpu.memory_space<vmem>>, vector<64x32xf32>
    %cst_10 = arith.constant dense<0.000000e+00> : vector<16x32xf32>
    %15 = tpu.matmul %13, %14, %cst_10 {dimension_numbers = #tpu.dot_dimension_numbers<[1], [0], [0], [1], [0, 0, 1, 1], [], []>} : vector<16x64xf32>, vector<64x32xf32>, vector<16x32xf32> -> vector<16x32xf32>
    %c0_11 = arith.constant 0 : index
    %c0_12 = arith.constant 0 : index
    %16 = vector.load %arg5[%c0_11, %c0_12] : memref<1x32xf32, #tpu.memory_space<vmem>>, vector<1x32xf32>
    %17 = vector.broadcast %16 : vector<1x32xf32> to vector<16x32xf32>
    %18 = arith.addf %15, %17 : vector<16x32xf32>
    %c0_13 = arith.constant 0 : index
    %c0_14 = arith.constant 0 : index
    %19 = vector.load %arg6[%c0_13, %c0_14] : memref<16x32xf32, #tpu.memory_space<vmem>>, vector<16x32xf32>
    tpu.vector_store %arg6[%c0_13, %c0_14], %18 {strides = array<i32>} : memref<16x32xf32, #tpu.memory_space<vmem>>, vector<16x32xf32>,
    return
  }
  func.func @transform_0(%arg0: i32) -> (i32, i32) {
    %c0_i32 = arith.constant 0 : i32
    %c0_i32_0 = arith.constant 0 : i32
    return %arg0, %c0_i32 : i32, i32
  }
  func.func @transform_1(%arg0: i32) -> (i32, i32) {
    %c0_i32 = arith.constant 0 : i32
    %c0_i32_0 = arith.constant 0 : i32
    %c0_i32_1 = arith.constant 0 : i32
    return %c0_i32, %c0_i32_0 : i32, i32
  }
  func.func @transform_2(%arg0: i32) -> (i32, i32) {
    %c0_i32 = arith.constant 0 : i32
    %c0_i32_0 = arith.constant 0 : i32
    %c0_i32_1 = arith.constant 0 : i32
    return %c0_i32, %c0_i32_0 : i32, i32
  }
  func.func @transform_3(%arg0: i32) -> (i32, i32) {
    %c0_i32 = arith.constant 0 : i32
    %c0_i32_0 = arith.constant 0 : i32
    %c0_i32_1 = arith.constant 0 : i32
    return %c0_i32, %c0_i32_0 : i32, i32
  }
  func.func @transform_4(%arg0: i32) -> (i32, i32) {
    %c0_i32 = arith.constant 0 : i32
    %c0_i32_0 = arith.constant 0 : i32
    %c0_i32_1 = arith.constant 0 : i32
    return %c0_i32, %c0_i32_0 : i32, i32
  }
  func.func @transform_5(%arg0: i32) -> (i32, i32) {
    %c0_i32 = arith.constant 0 : i32
    %c0_i32_0 = arith.constant 0 : i32
    return %arg0, %c0_i32 : i32, i32
  }
}

</mosaic_0001>

<llo_original>
// kernel: tpu_custom_call.1
$region0: #{tpu_custom_call.1}
  #allocation0 [shape = 'u32[]', space=smem, size = 0x4, offset = 0x4, fixed_abs, tag = 'smem constant byte address 0x4 - core index']
  #allocation1 [shape = 'u32[72,128]{1,0:T(1,128)}', space=vmem, size = 0x9000, scoped, tag = 'internal scratch']
  %s0 = inlined_call_operand.vmem [shape: f32[16,32], index: 0, kind: input, shape index: {}]
  %s1 = inlined_call_operand.vmem [shape: f32[32,64], index: 1, kind: input, shape index: {}]
  %s2 = inlined_call_operand.vmem [shape: f32[1,64], index: 2, kind: input, shape index: {}]
  %s3 = inlined_call_operand.vmem [shape: f32[64,32], index: 3, kind: input, shape index: {}]
  %s4 = inlined_call_operand.vmem [shape: f32[1,32], index: 4, kind: input, shape index: {}]
  %s5 = inlined_call_operand.hbm [shape: f32[16,32], index: 5, kind: output, shape index: {}]
  %s6 = sld [smem:[#allocation0]]
  $region30: #{tpu_custom_call.1} parent=0
    _
  %s8 = ssub.s32 1, %s6
  %s9 = scalar_select 0, %s8, %s6
  $region1: #{tpu_custom_call.1} parent=0
    #allocation2 [shape = 'u8[8192]{0}', space=vmem, size = 0x2000, scoped, tag = 'output window, operand 0, single buffered']
    #allocation3 [shape = 's32[1]{0}', space=sflag, size = 0x4, scoped, tag = 'scoped memory for tpu_custom_call.1']
    %10 = vsyncpa [#allocation3], 0
    // Predicated region
    $region2: #{tpu_custom_call.1} parent=1 // pred_check
      _
    $region3: #{tpu_custom_call.1} parent=1 // pred_check_branch
      %12 = sbr.rel (0) target = $region5
    $region4: #{tpu_custom_call.1} parent=1 // pred_region
      _
    $region5: #{tpu_custom_call.1} parent=1 // pred_fallthru
      _
    // Predicated region
    $region6: #{tpu_custom_call.1} parent=1 // pred_check
      _
    $region7: #{tpu_custom_call.1} parent=1 // pred_check_branch
      %14 = sbr.rel (0) target = $region9
    $region8: #{tpu_custom_call.1} parent=1 // pred_region
      _
    $region9: #{tpu_custom_call.1} parent=1 // pred_fallthru
      _
    // Predicated region
    $region10: #{tpu_custom_call.1} parent=1 // pred_check
      _
    $region11: #{tpu_custom_call.1} parent=1 // pred_check_branch
      %16 = sbr.rel (0) target = $region13
    $region12: #{tpu_custom_call.1} parent=1 // pred_region
      _
    $region13: #{tpu_custom_call.1} parent=1 // pred_fallthru
      _
    // Predicated region
    $region14: #{tpu_custom_call.1} parent=1 // pred_check
      _
    $region15: #{tpu_custom_call.1} parent=1 // pred_check_branch
      %18 = sbr.rel (0) target = $region17
    $region16: #{tpu_custom_call.1} parent=1 // pred_region
      _
    $region17: #{tpu_custom_call.1} parent=1 // pred_fallthru
      _
    // Predicated region
    $region18: #{tpu_custom_call.1} parent=1 // pred_check
      _
    $region19: #{tpu_custom_call.1} parent=1 // pred_check_branch
      %20 = sbr.rel (0) target = $region21
    $region20: #{tpu_custom_call.1} parent=1 // pred_region
      _
    $region21: #{tpu_custom_call.1} parent=1 // pred_fallthru
      _
    %v21 = vld [vmem:[%s0] sm:$0xff]
    %v22 = vld [vmem:[%s0 + $0x8] sm:$0xff]
    %v23 = vld [vmem:[%s1] sm:$0xff]
    %v24 = vld [vmem:[%s1 + $0x8] sm:$0xff]
    %v25 = vld [vmem:[%s1 + $0x10] sm:$0xff]
    %v26 = vld [vmem:[%s1 + $0x18] sm:$0xff]
    %v27 = vld [vmem:[%s2] sm:$0x1]
    %v29 = vperm.slane %v27, 0
    %vm31 = vcmask 261120
    %v33 = vsel %vm31, %v21, 0
    %v36 = vsel %vm31, %v22, 0
    %38 = vmatpush.msra.mxu0 0.0
    %39 = vmatpush.msra.mxu0 0.0
    %40 = vmatpush.msra.mxu0 0.0
    %41 = vmatpush.msra.mxu0 0.0
    %42 = vmatpush.msra.mxu0 0.0
    %43 = vmatpush.msra.mxu0 0.0
    %44 = vmatpush.msra.mxu0 0.0
    %45 = vmatpush.msra.mxu0 0.0
    %46 = vmatpush.msra.mxu0 0.0
    %47 = vmatpush.msra.mxu0 0.0
    %48 = vmatpush.msra.mxu0 0.0
    %49 = vmatpush.msra.mxu0 0.0
    %50 = vmatpush.msra.mxu0 %v26
    %51 = vmatpush.msra.mxu0 %v25
    %52 = vmatpush.msra.mxu0 %v24
    %53 = vmatpush.msra.mxu0 %v23
    %54 = vmatmul.f32.gmra.mxu0 %v33
    %v55 = vpop.f32.mrf.mxu0
    %v56 = vadd.f32 %v29, %v55
    %57 = vmatmul.f32.gmra.mxu0 %v36
    %v58 = vpop.f32.mrf.mxu0
    %v59 = vadd.f32 %v29, %v58
    %60 = vdwg.mxu0
    %v61 = vmul.f32 %v56, 0.5
    %v62 = vmul.f32 %v59, 0.5
    %v63 = vmul.f32 %v56, 0.70710677
    %v64 = vmul.f32 %v59, 0.70710677
    %v65 = vmul.f32 %v63, %v63
    %v66 = vmin.f32 16.0, %v65
    %v67 = vmul.f32 %v66, 2.1237322e-06
    %v68 = vadd.f32 %v67, 0.00028619796
    %v69 = vmul.f32 %v66, %v68
    %v70 = vadd.f32 %v69, 0.0036580483
    %v71 = vmul.f32 %v66, %v70
    %v72 = vadd.f32 %v71, 0.05243302
    %v73 = vmul.f32 %v66, %v72
    %v74 = vadd.f32 %v73, 0.18741608
    %v75 = vmul.f32 %v66, %v74
    %v76 = vadd.f32 %v75, 1.1283791
    %v77 = vmul.f32 %v63, %v76
    %v78 = vmul.f32 %v66, 3.8918573e-05
    %v79 = vadd.f32 %v78, 0.001143296
    %v80 = vmul.f32 %v66, %v79
    %v81 = vadd.f32 %v80, 0.014752088
    %v82 = vmul.f32 %v66, %v81
    %v83 = vadd.f32 %v82, 0.112945676
    %v84 = vmul.f32 %v66, %v83
    %v85 = vadd.f32 %v84, 0.4994258
    %v86 = vmul.f32 %v66, %v85
    %v87 = vadd.f32 %v86, 1.0
    %v88 = vrcp.pop %v87
    %v89 = vmul.f32 %v87, %v88
    %v90 = vsub.f32 1.0, %v89
    %v91 = vmul.f32 %v88, %v90
    %v92 = vadd.f32 %v88, %v91
    %vm93 = vweird.f32 %v87
    %vm94 = vweird.f32 %v88
    %vm95 = vmor %vm93, %vm94
    %v96 = vsel %vm95, %v88, %v92
    %v97 = vand.u32 2147483647, %v87
    %vm98 = vcmp.eq.f32.partialorder %v97, 8.507059e+37
    %v99 = vand.u32 %v87, 2147483648
    %v100 = vor.u32 1.1754944e-38, %v99
    %v101 = vsel %vm98, %v100, %v96
    %v102 = vmul.f32 %v77, %v101
    %v103 = vmin.f32 %v102, 1.0
    %v104 = vmax.f32 %v103, -1.0
    %v105 = vmul.f32 %v64, %v64
    %v106 = vmin.f32 16.0, %v105
    %v107 = vmul.f32 %v106, 2.1237322e-06
    %v108 = vadd.f32 %v107, 0.00028619796
    %v109 = vmul.f32 %v106, %v108
    %v110 = vadd.f32 %v109, 0.0036580483
    %v111 = vmul.f32 %v106, %v110
    %v112 = vadd.f32 %v111, 0.05243302
    %v113 = vmul.f32 %v106, %v112
    %v114 = vadd.f32 %v113, 0.18741608
    %v115 = vmul.f32 %v106, %v114
    %v116 = vadd.f32 %v115, 1.1283791
    %v117 = vmul.f32 %v64, %v116
    %v118 = vmul.f32 %v106, 3.8918573e-05
    %v119 = vadd.f32 %v118, 0.001143296
    %v120 = vmul.f32 %v106, %v119
    %v121 = vadd.f32 %v120, 0.014752088
    %v122 = vmul.f32 %v106, %v121
    %v123 = vadd.f32 %v122, 0.112945676
    %v124 = vmul.f32 %v106, %v123
    %v125 = vadd.f32 %v124, 0.4994258
    %v126 = vmul.f32 %v106, %v125
    %v127 = vadd.f32 %v126, 1.0
    %v128 = vrcp.pop %v127
    %v129 = vmul.f32 %v127, %v128
    %v130 = vsub.f32 1.0, %v129
    %v131 = vmul.f32 %v128, %v130
    %v132 = vadd.f32 %v128, %v131
    %vm133 = vweird.f32 %v127
    %vm134 = vweird.f32 %v128
    %vm135 = vmor %vm133, %vm134
    %v136 = vsel %vm135, %v128, %v132
    %v137 = vand.u32 2147483647, %v127
    %vm138 = vcmp.eq.f32.partialorder %v137, 8.507059e+37
    %v139 = vand.u32 %v127, 2147483648
    %v140 = vor.u32 1.1754944e-38, %v139
    %v141 = vsel %vm138, %v140, %v136
    %v142 = vmul.f32 %v117, %v141
    %v143 = vmin.f32 %v142, 1.0
    %v144 = vmax.f32 %v143, -1.0
    %v145 = vadd.f32 %v104, 1.0
    %v146 = vadd.f32 %v144, 1.0
    %v147 = vmul.f32 %v61, %v145
    %v148 = vmul.f32 %v62, %v146
    %v149 = vld [vmem:[%s3] sm:$0xff]
    %v150 = vld [vmem:[%s3 + $0x8] sm:$0xff]
    %v151 = vld [vmem:[%s3 + $0x10] sm:$0xff]
    %v152 = vld [vmem:[%s3 + $0x18] sm:$0xff]
    %v153 = vld [vmem:[%s3 + $0x20] sm:$0xff]
    %v154 = vld [vmem:[%s3 + $0x28] sm:$0xff]
    %v155 = vld [vmem:[%s3 + $0x30] sm:$0xff]
    %v156 = vld [vmem:[%s3 + $0x38] sm:$0xff]
    %v157 = vld [vmem:[%s4] sm:$0x1]
    %v159 = vperm.slane %v157, 0
    %vm161 = vcmask 523264
    %v163 = vsel %vm161, %v147, 0
    %v166 = vsel %vm161, %v148, 0
    %168 = vmatpush.msra.mxu0 0.0
    %169 = vmatpush.msra.mxu0 0.0
    %170 = vmatpush.msra.mxu0 0.0
    %171 = vmatpush.msra.mxu0 0.0
    %172 = vmatpush.msra.mxu0 0.0
    %173 = vmatpush.msra.mxu0 0.0
    %174 = vmatpush.msra.mxu0 0.0
    %175 = vmatpush.msra.mxu0 0.0
    %176 = vmatpush.msra.mxu0 %v156
    %177 = vmatpush.msra.mxu0 %v155
    %178 = vmatpush.msra.mxu0 %v154
    %179 = vmatpush.msra.mxu0 %v153
    %180 = vmatpush.msra.mxu0 %v152
    %181 = vmatpush.msra.mxu0 %v151
    %182 = vmatpush.msra.mxu0 %v150
    %183 = vmatpush.msra.mxu0 %v149
    %184 = vmatmul.f32.gmra.mxu0 %v163
    %v185 = vpop.f32.mrf.mxu0
    %v186 = vadd.f32 %v159, %v185
    %187 = vmatmul.f32.gmra.mxu0 %v166
    %v188 = vpop.f32.mrf.mxu0
    %v189 = vadd.f32 %v159, %v188
    %190 = vdwg.mxu0
    %191 = vst.msk [vmem:[#allocation2] sm:$0xff] %vm31, %v186
    %192 = vst.msk [vmem:[#allocation2 + $0x8] sm:$0xff] %vm31, %v189
    // Predicated region
    $region22: #{tpu_custom_call.1} parent=1 // pred_check
      _
    $region23: #{tpu_custom_call.1} parent=1 // pred_check_branch
      %194 = sbr.rel (0) target = $region25
    $region24: #{tpu_custom_call.1} parent=1 // pred_region
      %196 = vsyncadd [#allocation3], 0
      %s197 = sshll.u32 [#allocation2], 4
      %s198 = int_to_ptr.vmem [resolvable:$true] %s197
      %s199 = sshll.u32 %s5, 4
      %s200 = int_to_ptr.hbm [resolvable:$true] %s199
      %205 = dma.vmem_to_hbm [thread:$0]  %s198, 256, %s200, [#allocation3], 128, 128, 8
    $region25: #{tpu_custom_call.1} parent=1 // pred_fallthru
      _
    // Predicated region
    $region26: #{tpu_custom_call.1} parent=1 // pred_check
      _
    $region27: #{tpu_custom_call.1} parent=1 // pred_check_branch
      %207 = sbr.rel (0) target = $region29
    $region28: #{tpu_custom_call.1} parent=1 // pred_region
      %209 = dma.done [#allocation3], 256
    $region29: #{tpu_custom_call.1} parent=1 // pred_fallthru
      _
    %210 = vsyncpa [#allocation3], 1

</llo_original>
